<compile_context>
chip_gen: v6e
topology: v6e:2x2x1
jax: 0.10.0
libtpu: 0.0.40
codegen_flags: <defaults>
</compile_context>

<pallas_src>
import functools

import jax
import jax.numpy as jnp
from jax.experimental import pallas as pl
from jax.experimental.pallas import tpu as pltpu


def _round_up(x: int, m: int) -> int:
    return ((x + m - 1) // m) * m


def rope_with_long_lora(positions, query, key, long_lora_offsets,
                        cos_sin_cache, head_size, *, is_neox_style=True,
                        tm=256):
    """positions: [...]=T int32, query: [T, Hq*head_size], key: [T, Hk*head_size],
    long_lora_offsets: [T] int32 (punica long_lora_indices),
    cos_sin_cache: [C, rotary_dim] (concat of per-scaling-factor caches).
    Returns (rotated_query, rotated_key) with the input shapes."""
    if not is_neox_style:
        # TODO(synk): GPT-J interleaved (non-neox) rotation not implemented.
        raise NotImplementedError("only neox-style rotation is implemented")

    q_shape, k_shape = query.shape, key.shape
    pos_flat = positions.reshape(-1).astype(jnp.int32)
    off_flat = long_lora_offsets.reshape(-1).astype(jnp.int32)
    num_tokens = pos_flat.shape[0]
    C, rotary_dim = cos_sin_cache.shape
    half = rotary_dim // 2
    assert rotary_dim == 2 * half and rotary_dim <= head_size

    # Flat lane-dense 2D views (no per-head 3D blocks).
    q2 = query.reshape(num_tokens, -1)
    k2 = key.reshape(num_tokens, -1)
    fq, fk = q2.shape[1], k2.shape[1]
    hq, hk = fq // head_size, fk // head_size
    assert hq * head_size == fq and hk * head_size == fk

    # Wrapper-side gather of the per-token cos/sin rows (clamped), streamed
    # through the pipeline.  For bf16 models this also halves the cos/sin
    # HBM bytes since it is cast to the activation dtype here.
    idx = jnp.clip(pos_flat + off_flat, 0, C - 1)
    cos_sin = cos_sin_cache[idx].astype(query.dtype)          # (T, rotary_dim)

    # Token tiling: large tiles (default 256), multiple of 8 sublanes,
    # remainder handled by padding instead of an assert.
    tm_eff = _round_up(max(8, min(int(tm), _round_up(num_tokens, 8))), 8)
    padded_t = _round_up(num_tokens, tm_eff)
    if padded_t != num_tokens:
        pad = padded_t - num_tokens
        q2 = jnp.pad(q2, ((0, pad), (0, 0)))
        k2 = jnp.pad(k2, ((0, pad), (0, 0)))
        cos_sin = jnp.pad(cos_sin, ((0, pad), (0, 0)))
    grid = (padded_t // tm_eff,)

    n_max = max(hq, hk)

    def kernel(cs_ref, q_ref, k_ref, qo_ref, ko_ref):
        cs = cs_ref[...]                                      # (tm, rotary_dim)
        cos = cs[:, :half]
        sin = cs[:, half:]
        # Per-head multiplier rows, built ONCE per tile (hoisted, shared by
        # Q and K):  cos_h = [cos|cos|1...],  sin_h = [-sin|sin|0...].
        cos_h = jnp.concatenate([cos, cos], axis=1)
        sin_h = jnp.concatenate([-sin, sin], axis=1)
        if rotary_dim < head_size:
            ones = jnp.ones((cs.shape[0], head_size - rotary_dim), cs.dtype)
            zeros = jnp.zeros((cs.shape[0], head_size - rotary_dim), cs.dtype)
            cos_h = jnp.concatenate([cos_h, ones], axis=1)
            sin_h = jnp.concatenate([sin_h, zeros], axis=1)
        cos_full = jnp.concatenate([cos_h] * n_max, axis=1)   # (tm, n_max*hs)
        sin_full = jnp.concatenate([sin_h] * n_max, axis=1)

        def rotate(x, n_heads):
            total = n_heads * head_size
            # partner[i] = x[i+half] on first-half rotary lanes,
            #              x[i-half] on second-half rotary lanes (per head);
            # passthrough lanes are masked by sin=0 / cos=1.
            fwd = pltpu.roll(x, total - half, axis=1)   # fwd[i] = x[(i+half)%total]
            bwd = pltpu.roll(x, half, axis=1)           # bwd[i] = x[(i-half)%total]
            lane = jax.lax.broadcasted_iota(jnp.int32, (1, total), 1)
            first_half = (lane % head_size) < half
            partner = jnp.where(first_half, fwd, bwd)
            return x * cos_full[:, :total] + partner * sin_full[:, :total]

        qo_ref[...] = rotate(q_ref[...], hq).astype(qo_ref.dtype)
        ko_ref[...] = rotate(k_ref[...], hk).astype(ko_ref.dtype)

    bytes_accessed = (2 * q2.size * q2.dtype.itemsize
                      + 2 * k2.size * k2.dtype.itemsize
                      + cos_sin.size * cos_sin.dtype.itemsize)
    cost = pl.CostEstimate(flops=6 * padded_t * (hq + hk) * rotary_dim,
                           transcendentals=0,
                           bytes_accessed=bytes_accessed)

    q_out, k_out = pl.pallas_call(
        kernel,
        grid=grid,
        in_specs=[pl.BlockSpec((tm_eff, rotary_dim), lambda i: (i, 0)),
                  pl.BlockSpec((tm_eff, fq), lambda i: (i, 0)),
                  pl.BlockSpec((tm_eff, fk), lambda i: (i, 0))],
        out_specs=[pl.BlockSpec((tm_eff, fq), lambda i: (i, 0)),
                   pl.BlockSpec((tm_eff, fk), lambda i: (i, 0))],
        out_shape=(jax.ShapeDtypeStruct((padded_t, fq), query.dtype),
                   jax.ShapeDtypeStruct((padded_t, fk), key.dtype)),
        input_output_aliases={1: 0, 2: 1},        # RoPE is in-place in vLLM
        compiler_params=pltpu.CompilerParams(
            dimension_semantics=("parallel",),    # megacore split on v7x
            vmem_limit_bytes=32 * 1024 * 1024),
        cost_estimate=cost,
    )(cos_sin, q2, k2)

    if padded_t != num_tokens:
        q_out = q_out[:num_tokens]
        k_out = k_out[:num_tokens]
    return q_out.reshape(q_shape), k_out.reshape(k_shape)


# ----------------------------------------------------------------------------
# Host-side helpers: cache construction (LinearScalingRotaryEmbedding) and a
# pure-JAX reference matching vLLM's forward_native with offsets.
# ----------------------------------------------------------------------------
def build_linear_scaling_cos_sin_cache(rotary_dim, max_position_embeddings,
                                       base, scaling_factors):
    inv_freq = 1.0 / (base ** (jnp.arange(0, rotary_dim, 2, dtype=jnp.float32)
                               / rotary_dim))
    caches, factor_to_offset, off = [], {}, 0
    for s in sorted(set(scaling_factors)):
        max_len = int(max_position_embeddings * s)
        t = jnp.arange(max_len, dtype=jnp.float32) / s
        freqs = jnp.einsum("i,j->ij", t, inv_freq)
        caches.append(jnp.concatenate([jnp.cos(freqs), jnp.sin(freqs)],
                                      axis=-1))
        factor_to_offset[float(s)] = off
        off += max_len
    return jnp.concatenate(caches, axis=0), factor_to_offset


def reference_forward(positions, query, key, long_lora_offsets, cos_sin_cache,
                      head_size, rotary_dim):
    pos = positions.reshape(-1) + long_lora_offsets.reshape(-1)
    num_tokens = pos.shape[0]
    cos_sin = cos_sin_cache[pos]
    cos, sin = jnp.split(cos_sin, 2, axis=-1)

    def apply(x):
        xs = x.reshape(num_tokens, -1, head_size)
        x_rot, x_pass = xs[..., :rotary_dim], xs[..., rotary_dim:]
        x1, x2 = jnp.split(x_rot, 2, axis=-1)
        c, s = cos[:, None, :], sin[:, None, :]
        out = jnp.concatenate([x1 * c - x2 * s, x2 * c + x1 * s, x_pass],
                              axis=-1)
        return out.reshape(x.shape)

    return apply(query), apply(key)


if __name__ == "__main__":
    root = jax.random.PRNGKey(0)
    kq, kk = jax.random.split(root)

    # Small shapes consistent with the module's forward.
    batch, seq = 2, 8
    head_size, rotary_dim = 128, 128
    num_q_heads, num_kv_heads = 4, 2
    max_position_embeddings, rope_base = 16, 10000.0
    scaling_factors = [1.0, 4.0]          # base factor + one long-LoRA factor

    cache, factor_to_offset = build_linear_scaling_cos_sin_cache(
        rotary_dim, max_position_embeddings, rope_base, scaling_factors)

    num_tokens = batch * seq
    query = jax.random.normal(kq, (num_tokens, num_q_heads * head_size),
                              dtype=jnp.float32)
    key = jax.random.normal(kk, (num_tokens, num_kv_heads * head_size),
                            dtype=jnp.float32)

    positions = jnp.tile(jnp.arange(seq, dtype=jnp.int32), (batch, 1))
    # punica_wrapper.long_lora_indices: request 0 uses the base scaling factor
    # (cache offset 0), request 1 uses the long-context LoRA's factor.
    long_lora_offsets = jnp.array(
        [factor_to_offset[1.0]] * seq + [factor_to_offset[4.0]] * seq,
        dtype=jnp.int32)

    # Compute the reference BEFORE the kernel call (the kernel aliases its
    # q/k inputs to the outputs, mirroring vLLM's in-place RoPE).
    q_ref, k_ref = reference_forward(positions, query, key, long_lora_offsets,
                                     cache, head_size, rotary_dim)

    rope_fn = jax.jit(functools.partial(rope_with_long_lora,
                                        head_size=head_size, tm=8))
    q_out, k_out = rope_fn(positions, query, key, long_lora_offsets, cache)
    q_out = jax.block_until_ready(q_out)
    k_out = jax.block_until_ready(k_out)

    assert q_out.shape == (num_tokens, num_q_heads * head_size)
    assert k_out.shape == (num_tokens, num_kv_heads * head_size)
    assert jnp.allclose(q_out, q_ref, atol=1e-4, rtol=1e-4), "query mismatch"
    assert jnp.allclose(k_out, k_ref, atol=1e-4, rtol=1e-4), "key mismatch"

    print("KERNEL_OK")
</pallas_src>

<mosaic_0001>
module attributes {stable_mosaic.version = 11 : i64} {
  func.func @kernel(%arg0: i32, %arg1: memref<8x128xf32, #tpu.memory_space<vmem>>, %arg2: memref<8x512xf32, #tpu.memory_space<vmem>>, %arg3: memref<8x256xf32, #tpu.memory_space<vmem>>, %arg4: memref<8x512xf32, #tpu.memory_space<vmem>>, %arg5: memref<8x256xf32, #tpu.memory_space<vmem>>) attributes {dimension_semantics = [#tpu.dimension_semantics<parallel>], iteration_bounds = array<i64: 2>, scalar_prefetch = 0 : i64, scratch_operands = 0 : i64, tpu.core_type = #tpu.core_type<tc>, window_params = [{transform_indices = @transform_0, window_bounds = array<i64: 8, 128>}, {transform_indices = @transform_1, window_bounds = array<i64: 8, 512>}, {transform_indices = @transform_2, window_bounds = array<i64: 8, 256>}, {transform_indices = @transform_3, window_bounds = array<i64: 8, 512>}, {transform_indices = @transform_4, window_bounds = array<i64: 8, 256>}]} {
    %c0 = arith.constant 0 : index
    %c0_0 = arith.constant 0 : index
    %0 = vector.load %arg1[%c0, %c0_0] : memref<8x128xf32, #tpu.memory_space<vmem>>, vector<8x128xf32>
    %1 = vector.extract_strided_slice %0 {offsets = [0, 0], sizes = [8, 64], strides = [1, 1]} : vector<8x128xf32> to vector<8x64xf32>
    %2 = vector.extract_strided_slice %0 {offsets = [0, 64], sizes = [8, 64], strides = [1, 1]} : vector<8x128xf32> to vector<8x64xf32>
    %3 = tpu.concatenate %1, %1 in 1 : vector<8x64xf32>, vector<8x64xf32> -> vector<8x128xf32>
    %cst = arith.constant 0.000000e+00 : f32
    %4 = vector.broadcast %cst : f32 to vector<8x64xf32>
    %5 = arith.subf %4, %2 : vector<8x64xf32>
    %6 = tpu.concatenate %5, %2 in 1 : vector<8x64xf32>, vector<8x64xf32> -> vector<8x128xf32>
    %7 = tpu.concatenate %3, %3, %3, %3 in 1 : vector<8x128xf32>, vector<8x128xf32>, vector<8x128xf32>, vector<8x128xf32> -> vector<8x512xf32>
    %8 = tpu.concatenate %6, %6, %6, %6 in 1 : vector<8x128xf32>, vector<8x128xf32>, vector<8x128xf32>, vector<8x128xf32> -> vector<8x512xf32>
    %c0_1 = arith.constant 0 : index
    %c0_2 = arith.constant 0 : index
    %9 = vector.load %arg2[%c0_1, %c0_2] : memref<8x512xf32, #tpu.memory_space<vmem>>, vector<8x512xf32>
    %c448_i32 = arith.constant 448 : i32
    %10 = tpu.dynamic_rotate %9 by %c448_i32 dim 1 : vector<8x512xf32>, i32 -> vector<8x512xf32>
    %c64_i32 = arith.constant 64 : i32
    %11 = tpu.dynamic_rotate %9 by %c64_i32 dim 1 : vector<8x512xf32>, i32 -> vector<8x512xf32>
    %12 = tpu.iota {dimensions = array<i32: 1>} : vector<1x512xi32>
    %c128_i32 = arith.constant 128 : i32
    %c0_i32 = arith.constant 0 : i32
    %13 = arith.cmpi eq, %c128_i32, %c0_i32 : i32
    %c1_i32 = arith.constant 1 : i32
    %14 = arith.select %13, %c1_i32, %c128_i32 : i32
    %15 = vector.broadcast %14 : i32 to vector<1x512xi32>
    %16 = arith.remsi %12, %15 : vector<1x512xi32>
    %c0_i32_3 = arith.constant 0 : i32
    %17 = vector.broadcast %c0_i32_3 : i32 to vector<1x512xi32>
    %18 = arith.cmpi ne, %16, %17 : vector<1x512xi32>
    %c0_i32_4 = arith.constant 0 : i32
    %19 = vector.broadcast %c0_i32_4 : i32 to vector<1x512xi32>
    %20 = arith.cmpi slt, %16, %19 : vector<1x512xi32>
    %c0_i32_5 = arith.constant 0 : i32
    %21 = arith.cmpi slt, %14, %c0_i32_5 : i32
    %22 = vector.broadcast %21 : i1 to vector<1x512xi1>
    %23 = vector.broadcast %22 : vector<1x512xi1> to vector<1x512xi1>
    %24 = arith.xori %20, %23 : vector<1x512xi1>
    %25 = arith.andi %24, %18 : vector<1x512xi1>
    %26 = vector.broadcast %14 : i32 to vector<1x512xi32>
    %27 = arith.addi %16, %26 : vector<1x512xi32>
    %28 = arith.select %25, %27, %16 : vector<1x512xi1>, vector<1x512xi32>
    %c64_i32_6 = arith.constant 64 : i32
    %29 = vector.broadcast %c64_i32_6 : i32 to vector<1x512xi32>
    %30 = arith.cmpi slt, %28, %29 : vector<1x512xi32>
    %31 = vector.shape_cast %30 : vector<1x512xi1> to vector<1x512xi1>
    %32 = vector.broadcast %31 : vector<1x512xi1> to vector<8x512xi1>
    %33 = arith.select %32, %10, %11 : vector<8x512xi1>, vector<8x512xf32>
    %34 = arith.mulf %9, %7 : vector<8x512xf32>
    %35 = arith.mulf %33, %8 : vector<8x512xf32>
    %36 = arith.addf %34, %35 : vector<8x512xf32>
    %c0_7 = arith.constant 0 : index
    %c0_8 = arith.constant 0 : index
    %37 = vector.load %arg4[%c0_7, %c0_8] : memref<8x512xf32, #tpu.memory_space<vmem>>, vector<8x512xf32>
    tpu.vector_store %arg4[%c0_7, %c0_8], %36 {strides = array<i32>} : memref<8x512xf32, #tpu.memory_space<vmem>>, vector<8x512xf32>,
    %c0_9 = arith.constant 0 : index
    %c0_10 = arith.constant 0 : index
    %38 = vector.load %arg3[%c0_9, %c0_10] : memref<8x256xf32, #tpu.memory_space<vmem>>, vector<8x256xf32>
    %c192_i32 = arith.constant 192 : i32
    %39 = tpu.dynamic_rotate %38 by %c192_i32 dim 1 : vector<8x256xf32>, i32 -> vector<8x256xf32>
    %c64_i32_11 = arith.constant 64 : i32
    %40 = tpu.dynamic_rotate %38 by %c64_i32_11 dim 1 : vector<8x256xf32>, i32 -> vector<8x256xf32>
    %41 = tpu.iota {dimensions = array<i32: 1>} : vector<1x256xi32>
    %c128_i32_12 = arith.constant 128 : i32
    %c0_i32_13 = arith.constant 0 : i32
    %42 = arith.cmpi eq, %c128_i32_12, %c0_i32_13 : i32
    %c1_i32_14 = arith.constant 1 : i32
    %43 = arith.select %42, %c1_i32_14, %c128_i32_12 : i32
    %44 = vector.broadcast %43 : i32 to vector<1x256xi32>
    %45 = arith.remsi %41, %44 : vector<1x256xi32>
    %c0_i32_15 = arith.constant 0 : i32
    %46 = vector.broadcast %c0_i32_15 : i32 to vector<1x256xi32>
    %47 = arith.cmpi ne, %45, %46 : vector<1x256xi32>
    %c0_i32_16 = arith.constant 0 : i32
    %48 = vector.broadcast %c0_i32_16 : i32 to vector<1x256xi32>
    %49 = arith.cmpi slt, %45, %48 : vector<1x256xi32>
    %c0_i32_17 = arith.constant 0 : i32
    %50 = arith.cmpi slt, %43, %c0_i32_17 : i32
    %51 = vector.broadcast %50 : i1 to vector<1x256xi1>
    %52 = vector.broadcast %51 : vector<1x256xi1> to vector<1x256xi1>
    %53 = arith.xori %49, %52 : vector<1x256xi1>
    %54 = arith.andi %53, %47 : vector<1x256xi1>
    %55 = vector.broadcast %43 : i32 to vector<1x256xi32>
    %56 = arith.addi %45, %55 : vector<1x256xi32>
    %57 = arith.select %54, %56, %45 : vector<1x256xi1>, vector<1x256xi32>
    %c64_i32_18 = arith.constant 64 : i32
    %58 = vector.broadcast %c64_i32_18 : i32 to vector<1x256xi32>
    %59 = arith.cmpi slt, %57, %58 : vector<1x256xi32>
    %60 = vector.shape_cast %59 : vector<1x256xi1> to vector<1x256xi1>
    %61 = vector.broadcast %60 : vector<1x256xi1> to vector<8x256xi1>
    %62 = arith.select %61, %39, %40 : vector<8x256xi1>, vector<8x256xf32>
    %63 = vector.extract_strided_slice %7 {offsets = [0, 0], sizes = [8, 256], strides = [1, 1]} : vector<8x512xf32> to vector<8x256xf32>
    %64 = arith.mulf %38, %63 : vector<8x256xf32>
    %65 = vector.extract_strided_slice %8 {offsets = [0, 0], sizes = [8, 256], strides = [1, 1]} : vector<8x512xf32> to vector<8x256xf32>
    %66 = arith.mulf %62, %65 : vector<8x256xf32>
    %67 = arith.addf %64, %66 : vector<8x256xf32>
    %c0_19 = arith.constant 0 : index
    %c0_20 = arith.constant 0 : index
    %68 = vector.load %arg5[%c0_19, %c0_20] : memref<8x256xf32, #tpu.memory_space<vmem>>, vector<8x256xf32>
    tpu.vector_store %arg5[%c0_19, %c0_20], %67 {strides = array<i32>} : memref<8x256xf32, #tpu.memory_space<vmem>>, vector<8x256xf32>,
    return
  }
  func.func @transform_0(%arg0: i32) -> (i32, i32) {
    %c0_i32 = arith.constant 0 : i32
    %c0_i32_0 = arith.constant 0 : i32
    return %arg0, %c0_i32 : i32, i32
  }
  func.func @transform_1(%arg0: i32) -> (i32, i32) {
    %c0_i32 = arith.constant 0 : i32
    %c0_i32_0 = arith.constant 0 : i32
    return %arg0, %c0_i32 : i32, i32
  }
  func.func @transform_2(%arg0: i32) -> (i32, i32) {
    %c0_i32 = arith.constant 0 : i32
    %c0_i32_0 = arith.constant 0 : i32
    return %arg0, %c0_i32 : i32, i32
  }
  func.func @transform_3(%arg0: i32) -> (i32, i32) {
    %c0_i32 = arith.constant 0 : i32
    %c0_i32_0 = arith.constant 0 : i32
    return %arg0, %c0_i32 : i32, i32
  }
  func.func @transform_4(%arg0: i32) -> (i32, i32) {
    %c0_i32 = arith.constant 0 : i32
    %c0_i32_0 = arith.constant 0 : i32
    return %arg0, %c0_i32 : i32, i32
  }
}

</mosaic_0001>

<llo_original>
// kernel: rope_with_long_lora.1
$region0: #{rope_with_long_lora.1}
  #allocation0 [shape = 'u32[]', space=smem, size = 0x4, offset = 0x4, fixed_abs, tag = 'smem constant byte address 0x4 - core index']
  #allocation1 [shape = 'u32[144,128]{1,0:T(1,128)}', space=vmem, size = 0x12000, scoped, tag = 'internal scratch']
  %s0 = inlined_call_operand.vmem [shape: f32[16,128], index: 0, kind: input, shape index: {}]
  %s1 = inlined_call_operand.hbm [shape: f32[16,512], index: 1, kind: input, shape index: {}, may-alias: {1,3}]
  %s2 = inlined_call_operand.hbm [shape: f32[16,256], index: 2, kind: input, shape index: {}, may-alias: {2,4}]
  %s3 = inlined_call_operand.hbm [shape: f32[16,512], index: 3, kind: output, shape index: {0}, may-alias: {1,3}]
  %s4 = inlined_call_operand.hbm [shape: f32[16,256], index: 4, kind: output, shape index: {1}, may-alias: {2,4}]
  %5 = xla_tuple %s3, %s4
  %s6 = sld [smem:[#allocation0]]
  $region61: #{rope_with_long_lora.1} parent=0
    _
  %s8 = ssub.s32 1, %s6
  %s9 = scalar_select 0, %s8, %s6
  $region1: #{rope_with_long_lora.1} parent=0
    #allocation2 [shape = 'u8[32768]{0}', space=vmem, size = 0x8000, scoped, tag = 'input window, operand 1']
    #allocation3 [shape = 's32[2]{0}', space=sflag, size = 0x8, scoped, tag = 'scoped memory for rope_with_long_lora.1']
    #allocation4 [shape = 's32[2]{0}', space=sflag, size = 0x8, scoped, tag = 'scoped memory for rope_with_long_lora.1']
    #allocation5 [shape = 'u8[16384]{0}', space=vmem, size = 0x4000, scoped, tag = 'input window, operand 2']
    #allocation6 [shape = 's32[2]{0}', space=sflag, size = 0x8, scoped, tag = 'scoped memory for rope_with_long_lora.1']
    #allocation7 [shape = 'u8[32768]{0}', space=vmem, size = 0x8000, scoped, tag = 'output window, operand 0']
    #allocation8 [shape = 'u8[16384]{0}', space=vmem, size = 0x4000, scoped, tag = 'output window, operand 1']
    #allocation9 [shape = 's32[2]{0}', space=sflag, size = 0x8, scoped, tag = 'scoped memory for rope_with_long_lora.1']
    %10 = vsyncpa [#allocation3], 0
    %s11 = scalar_lea.sflag [#allocation3], 1
    %12 = vsyncpa %s11, 0
    %13 = vsyncpa [#allocation6], 0
    %s14 = scalar_lea.sflag [#allocation6], 1
    %15 = vsyncpa %s14, 0
    %16 = vsyncpa [#allocation4], 0
    %s17 = scalar_lea.sflag [#allocation4], 1
    %18 = vsyncpa %s17, 0
    %19 = vsyncpa [#allocation9], 0
    %s20 = scalar_lea.sflag [#allocation9], 1
    %21 = vsyncpa %s20, 0
    loop: start=0, step=1, limit=4
    $region2: #{rope_with_long_lora.1} parent=1 // loop_pre_header
      _
    $region3: #{rope_with_long_lora.1} parent=1 // loop_header
      %s23 = sphi 0, %s27
      %p24 = scmp.ge.s32.totalorder %s23, 4
      %s33 = sphi 0, %s35
      %s36 = sphi 0, %s33
      %s37 = sphi 0, %s36
      %s53 = sphi 0, %s37
      %s59 = sphi 0, %s61
      %s62 = sphi 0, %s59
      %s63 = sphi 0, %s62
      %s79 = sphi 0, %s63
      %s85 = sphi 0, %s87
      %s88 = sphi 0, %s85
      %s89 = sphi 0, %s88
      %s105 = sphi 0, %s89
      %s111 = sphi 0, %s113
      %s114 = sphi 0, %s111
      %s115 = sphi 0, %s114
      %s131 = sphi 0, %s115
      %s137 = sphi 0, %s139
      %s140 = sphi 0, %s137
      %s141 = sphi 0, %s140
      %s157 = sphi 0, %s141
    $region4: #{rope_with_long_lora.1} parent=1 // loop_header_branch
      %26 = sbr.rel (%p24) target = $region8
    $region5: #{rope_with_long_lora.1} parent=1 // loop_body
      %s28 = ssub.s32 %s23, 1
      %s29 = ssub.s32 %s23, 2
      %s30 = sadd.s32 %s23, 1
      %s31 = ssub.s32 %s23, %s30
      %p32 = scmp.eq.s32.totalorder %s31, 0
      %s34 = sadd.s32 %s33, 1
      %s35 = scalar_select %p32, %s33, %s34
      %p38 = pneg %p32
      %p39 = scmp.eq.s32.totalorder %s23, 1
      %p40 = por %p38, %p39
      %p41 = scmp.ne.s32.totalorder %s33, %s36
      %p42 = scmp.eq.s32.totalorder %s23, 0
      %p43 = por %p41, %p42
      %p44 = scmp.ne.s32.totalorder %s33, %s36
      %p45 = scmp.eq.s32.totalorder %s28, 1
      %p46 = por %p44, %p45
      %p47 = scmp.ne.s32.totalorder %s36, %s37
      %p48 = scmp.eq.s32.totalorder %s28, 0
      %p49 = por %p47, %p48
      %p50 = scmp.ne.s32.totalorder %s36, %s37
      %p51 = scmp.eq.s32.totalorder %s29, 1
      %p52 = por %p50, %p51
      %p54 = scmp.ne.s32.totalorder %s37, %s53
      %p55 = scmp.eq.s32.totalorder %s29, 0
      %p56 = por %p54, %p55
      %s57 = ssub.s32 %s23, %s30
      %p58 = scmp.eq.s32.totalorder %s57, 0
      %s60 = sadd.s32 %s59, 1
      %s61 = scalar_select %p58, %s59, %s60
      %p64 = pneg %p58
      %p65 = scmp.eq.s32.totalorder %s23, 1
      %p66 = por %p64, %p65
      %p67 = scmp.ne.s32.totalorder %s59, %s62
      %p68 = scmp.eq.s32.totalorder %s23, 0
      %p69 = por %p67, %p68
      %p70 = scmp.ne.s32.totalorder %s59, %s62
      %p71 = scmp.eq.s32.totalorder %s28, 1
      %p72 = por %p70, %p71
      %p73 = scmp.ne.s32.totalorder %s62, %s63
      %p74 = scmp.eq.s32.totalorder %s28, 0
      %p75 = por %p73, %p74
      %p76 = scmp.ne.s32.totalorder %s62, %s63
      %p77 = scmp.eq.s32.totalorder %s29, 1
      %p78 = por %p76, %p77
      %p80 = scmp.ne.s32.totalorder %s63, %s79
      %p81 = scmp.eq.s32.totalorder %s29, 0
      %p82 = por %p80, %p81
      %s83 = ssub.s32 %s23, %s30
      %p84 = scmp.eq.s32.totalorder %s83, 0
      %s86 = sadd.s32 %s85, 1
      %s87 = scalar_select %p84, %s85, %s86
      %p90 = pneg %p84
      %p91 = scmp.eq.s32.totalorder %s23, 1
      %p92 = por %p90, %p91
      %p93 = scmp.ne.s32.totalorder %s85, %s88
      %p94 = scmp.eq.s32.totalorder %s23, 0
      %p95 = por %p93, %p94
      %p96 = scmp.ne.s32.totalorder %s85, %s88
      %p97 = scmp.eq.s32.totalorder %s28, 1
      %p98 = por %p96, %p97
      %p99 = scmp.ne.s32.totalorder %s88, %s89
      %p100 = scmp.eq.s32.totalorder %s28, 0
      %p101 = por %p99, %p100
      %p102 = scmp.ne.s32.totalorder %s88, %s89
      %p103 = scmp.eq.s32.totalorder %s29, 1
      %p104 = por %p102, %p103
      %p106 = scmp.ne.s32.totalorder %s89, %s105
      %p107 = scmp.eq.s32.totalorder %s29, 0
      %p108 = por %p106, %p107
      %s109 = ssub.s32 %s23, %s30
      %p110 = scmp.eq.s32.totalorder %s109, 0
      %s112 = sadd.s32 %s111, 1
      %s113 = scalar_select %p110, %s111, %s112
      %p116 = pneg %p110
      %p117 = scmp.eq.s32.totalorder %s23, 1
      %p118 = por %p116, %p117
      %p119 = scmp.ne.s32.totalorder %s111, %s114
      %p120 = scmp.eq.s32.totalorder %s23, 0
      %p121 = por %p119, %p120
      %p122 = scmp.ne.s32.totalorder %s111, %s114
      %p123 = scmp.eq.s32.totalorder %s28, 1
      %p124 = por %p122, %p123
      %p125 = scmp.ne.s32.totalorder %s114, %s115
      %p126 = scmp.eq.s32.totalorder %s28, 0
      %p127 = por %p125, %p126
      %p128 = scmp.ne.s32.totalorder %s114, %s115
      %p129 = scmp.eq.s32.totalorder %s29, 1
      %p130 = por %p128, %p129
      %p132 = scmp.ne.s32.totalorder %s115, %s131
      %p133 = scmp.eq.s32.totalorder %s29, 0
      %p134 = por %p132, %p133
      %s135 = ssub.s32 %s23, %s30
      %p136 = scmp.eq.s32.totalorder %s135, 0
      %s138 = sadd.s32 %s137, 1
      %s139 = scalar_select %p136, %s137, %s138
      %p142 = pneg %p136
      %p143 = scmp.eq.s32.totalorder %s23, 1
      %p144 = por %p142, %p143
      %p145 = scmp.ne.s32.totalorder %s137, %s140
      %p146 = scmp.eq.s32.totalorder %s23, 0
      %p147 = por %p145, %p146
      %p148 = scmp.ne.s32.totalorder %s137, %s140
      %p149 = scmp.eq.s32.totalorder %s28, 1
      %p150 = por %p148, %p149
      %p151 = scmp.ne.s32.totalorder %s140, %s141
      %p152 = scmp.eq.s32.totalorder %s28, 0
      %p153 = por %p151, %p152
      %p154 = scmp.ne.s32.totalorder %s140, %s141
      %p155 = scmp.eq.s32.totalorder %s29, 1
      %p156 = por %p154, %p155
      %p158 = scmp.ne.s32.totalorder %s141, %s157
      %p159 = scmp.eq.s32.totalorder %s29, 0
      %p160 = por %p158, %p159
      %p161 = scmp.le.s32.totalorder 1, %s23
      %p162 = scmp.lt.s32.totalorder %s23, 3
      %p163 = pnand %p161, %p162
      %p164 = pneg %p163
      // Predicated region
      $region9: #{rope_with_long_lora.1} parent=5 // pred_check
        _
      $region10: #{rope_with_long_lora.1} parent=5 // pred_check_branch
        %166 = sbr.rel (%p163) target = $region12
      $region11: #{rope_with_long_lora.1} parent=5 // pred_region
        %s167 = ssub.s32 %s23, 1
      $region12: #{rope_with_long_lora.1} parent=5 // pred_fallthru
        _
      %p168 = scmp.lt.s32.totalorder %s23, 2
      // Predicated region
      $region13: #{rope_with_long_lora.1} parent=5 // pred_check
        %p169 = pneg %p168
      $region14: #{rope_with_long_lora.1} parent=5 // pred_check_branch
        %171 = sbr.rel (%p169) target = $region16
      $region15: #{rope_with_long_lora.1} parent=5 // pred_region
        // Predicated region
        $region17: #{rope_with_long_lora.1} parent=15 // pred_check
          %p172 = pneg %p43
        $region18: #{rope_with_long_lora.1} parent=15 // pred_check_branch
          %174 = sbr.rel (%p172) target = $region20
        $region19: #{rope_with_long_lora.1} parent=15 // pred_region
          %p175 = scmp.lt.s32.totalorder %s23, 1
          %s176 = scalar_select %p175, %s23, 1
          %s177 = smul.addr %s176, 8
          %s178 = scalar_lea.vmem %s0, %s177
        $region20: #{rope_with_long_lora.1} parent=15 // pred_fallthru
          _
        // Predicated region
        $region21: #{rope_with_long_lora.1} parent=15 // pred_check
          %p179 = pneg %p69
        $region22: #{rope_with_long_lora.1} parent=15 // pred_check_branch
          %181 = sbr.rel (%p179) target = $region24
        $region23: #{rope_with_long_lora.1} parent=15 // pred_region
          %s182 = sand.u32 %s59, 1
          %s183 = scalar_lea.sflag [#allocation3], %s182
          %s184 = sand.u32 %s59, 1
          %s185 = smul.addr %s184, 32
          %s186 = scalar_lea.vmem [#allocation2], %s185
          %s188 = ssub.s32 512, 512
          %189 = vsyncadd %s183, %s188
          %s190 = smul.addr %s23, 4
          %s191 = smul.addr %s190, 128
          %s192 = scalar_lea.hbm %s1, %s191
          %s194 = sshll.u32 %s186, 4
          %s195 = int_to_ptr.vmem [resolvable:$true] %s194
          %197 = dma.hbm_to_vmem [thread:$0]  %s192, 512, %s195, %s183
        $region24: #{rope_with_long_lora.1} parent=15 // pred_fallthru
          _
        // Predicated region
        $region25: #{rope_with_long_lora.1} parent=15 // pred_check
          %p198 = pneg %p95
        $region26: #{rope_with_long_lora.1} parent=15 // pred_check_branch
          %200 = sbr.rel (%p198) target = $region28
        $region27: #{rope_with_long_lora.1} parent=15 // pred_region
          %s201 = sand.u32 %s85, 1
          %s202 = scalar_lea.sflag [#allocation6], %s201
          %s203 = sand.u32 %s85, 1
          %s204 = smul.addr %s203, 16
          %s205 = scalar_lea.vmem [#allocation5], %s204
          %s207 = ssub.s32 256, 256
          %208 = vsyncadd %s202, %s207
          %s209 = smul.addr %s23, 2
          %s210 = smul.addr %s209, 128
          %s211 = scalar_lea.hbm %s2, %s210
          %s213 = sshll.u32 %s205, 4
          %s214 = int_to_ptr.vmem [resolvable:$true] %s213
          %216 = dma.hbm_to_vmem [thread:$0]  %s211, 256, %s214, %s202
        $region28: #{rope_with_long_lora.1} parent=15 // pred_fallthru
          _
      $region16: #{rope_with_long_lora.1} parent=5 // pred_fallthru
        _
      %p217 = scmp.le.s32.totalorder 1, %s23
      %p218 = scmp.lt.s32.totalorder %s23, 3
      %p219 = pnand %p217, %p218
      %p220 = pneg %p219
      // Predicated region
      $region29: #{rope_with_long_lora.1} parent=5 // pred_check
        _
      $region30: #{rope_with_long_lora.1} parent=5 // pred_check_branch
        %222 = sbr.rel (%p219) target = $region32
      $region31: #{rope_with_long_lora.1} parent=5 // pred_region
        %s223 = ssub.s32 %s23, 1
        %s224 = sand.u32 %s62, 1
        %s225 = scalar_lea.sflag [#allocation3], %s224
        %s226 = sand.u32 %s62, 1
        %s227 = smul.addr %s226, 32
        %s228 = scalar_lea.vmem [#allocation2], %s227
        // Predicated region
        $region33: #{rope_with_long_lora.1} parent=31 // pred_check
          %p229 = pneg %p75
        $region34: #{rope_with_long_lora.1} parent=31 // pred_check_branch
          %231 = sbr.rel (%p229) target = $region36
        $region35: #{rope_with_long_lora.1} parent=31 // pred_region
          %232 = dma.done %s225, 512
        $region36: #{rope_with_long_lora.1} parent=31 // pred_fallthru
          _
        %s233 = sand.u32 %s88, 1
        %s234 = scalar_lea.sflag [#allocation6], %s233
        %s235 = sand.u32 %s88, 1
        %s236 = smul.addr %s235, 16
        %s237 = scalar_lea.vmem [#allocation5], %s236
        // Predicated region
        $region37: #{rope_with_long_lora.1} parent=31 // pred_check
          %p238 = pneg %p101
        $region38: #{rope_with_long_lora.1} parent=31 // pred_check_branch
          %240 = sbr.rel (%p238) target = $region40
        $region39: #{rope_with_long_lora.1} parent=31 // pred_region
          %241 = dma.done %s234, 256
        $region40: #{rope_with_long_lora.1} parent=31 // pred_fallthru
          _
        %p242 = scmp.lt.s32.totalorder %s28, 1
        %s243 = scalar_select %p242, %s28, 1
        %s244 = smul.addr %s243, 8
        %s245 = scalar_lea.vmem %s0, %s244
        %p246 = pneg %p49
        %p247 = pneg %p46
        %s248 = sand.u32 %s62, 1
        %s249 = scalar_lea.sflag [#allocation3], %s248
        %s250 = sand.u32 %s62, 1
        %s251 = smul.addr %s250, 32
        %s252 = scalar_lea.vmem [#allocation2], %s251
        %p253 = pneg %p75
        %p254 = pneg %p72
        %s255 = sand.u32 %s88, 1
        %s256 = scalar_lea.sflag [#allocation6], %s255
        %s257 = sand.u32 %s88, 1
        %s258 = smul.addr %s257, 16
        %s259 = scalar_lea.vmem [#allocation5], %s258
        %p260 = pneg %p101
        %p261 = pneg %p98
        %p262 = pneg %p127
        %p263 = pneg %p124
        %s264 = sand.u32 %s114, 1
        %s265 = scalar_lea.sflag [#allocation4], %s264
        %s266 = sand.u32 %s114, 1
        %s267 = smul.addr %s266, 32
        %s268 = scalar_lea.vmem [#allocation7], %s267
        %p269 = pneg %p153
        %p270 = pneg %p150
        %s271 = sand.u32 %s140, 1
        %s272 = scalar_lea.sflag [#allocation9], %s271
        %s273 = sand.u32 %s140, 1
        %s274 = smul.addr %s273, 16
        %s275 = scalar_lea.vmem [#allocation8], %s274
        %p276 = scmp.lt.s32.totalorder %s28, 1
        %s277 = scalar_select %p276, %s28, 1
        %s278 = smul.addr %s277, 8
        %s279 = scalar_lea.vmem %s0, %s278
        %v280 = vld [vmem:[%s279] sm:$0xff]
        %282 = vrot.lane.b32.xlu0 %v280, 64
        %v283 = vpop.permute.xlu0 %282
        %vm285 = vcmask 523264
        %v286 = vsel %vm285, %v280, %v283
        %v287 = vsub.f32 0.0, %v280
        %289 = vrot.lane.b32.xlu0 %v287, 64
        %v290 = vpop.permute.xlu0 %289
        %v292 = vsel %vm285, %v290, %v280
        %v293 = vld [vmem:[%s228] sm:$0xff]
        %v294 = vld [vmem:[%s228 + $0x8] sm:$0xff]
        %v295 = vld [vmem:[%s228 + $0x10] sm:$0xff]
        %v296 = vld [vmem:[%s228 + $0x18] sm:$0xff]
        %297 = vrot.lane.b32.xlu0 %v293, 64
        %v298 = vpop.permute.xlu0 %297
        %299 = vrot.lane.b32.xlu0 %v294, 64
        %v300 = vpop.permute.xlu0 %299
        %301 = vrot.lane.b32.xlu0 %v295, 64
        %v302 = vpop.permute.xlu0 %301
        %303 = vrot.lane.b32.xlu0 %v296, 64
        %v304 = vpop.permute.xlu0 %303
        %v305 = vlaneseq
        %v306 = vand.u32 %v305, 127
        %vm307 = vcmp.lt.s32.totalorder %v306, 64
        %v308 = vsel %vm307, %v302, %v304
        %v309 = vsel %vm307, %v300, %v302
        %v310 = vsel %vm307, %v298, %v300
        %v311 = vsel %vm307, %v304, %v298
        %v312 = vadd.s32 %v306, 128
        %v313 = vadd.s32 %v306, 256
        %v314 = vadd.s32 %v306, 384
        %vm315 = vcmp.lt.s32.totalorder %v306, 0
        %v316 = vsub.s32 0, %v306
        %v317 = vsel %vm315, %v316, %v306
        %v318 = vshrl.u32 %v317, 7
        %v319 = vand.u32 %v317, 127
        %v320 = vsub.s32 0, %v319
        %v321 = vsel %vm315, %v320, %v319
        %vm322 = vcmp.lt.s32.totalorder %v312, 0
        %v323 = vsub.s32 0, %v312
        %v324 = vsel %vm322, %v323, %v312
        %v325 = vshrl.u32 %v324, 7
        %v326 = vand.u32 %v324, 127
        %v327 = vsub.s32 0, %v326
        %v328 = vsel %vm322, %v327, %v326
        %vm329 = vcmp.lt.s32.totalorder %v313, 0
        %v330 = vsub.s32 0, %v313
        %v331 = vsel %vm329, %v330, %v313
        %v332 = vshrl.u32 %v331, 7
        %v333 = vand.u32 %v331, 127
        %v334 = vsub.s32 0, %v333
        %v335 = vsel %vm329, %v334, %v333
        %vm336 = vcmp.lt.s32.totalorder %v314, 0
        %v337 = vsub.s32 0, %v314
        %v338 = vsel %vm336, %v337, %v314
        %v339 = vshrl.u32 %v338, 7
        %v340 = vand.u32 %v338, 127
        %v341 = vsub.s32 0, %v340
        %v342 = vsel %vm336, %v341, %v340
        %vm343 = vcmp.ne.s32.totalorder %v321, 0
        %vm344 = vcmp.ne.s32.totalorder %v328, 0
        %vm345 = vcmp.ne.s32.totalorder %v335, 0
        %vm346 = vcmp.ne.s32.totalorder %v342, 0
        %vm347 = vcmp.lt.s32.totalorder %v321, 0
        %vm348 = vcmp.lt.s32.totalorder %v328, 0
        %vm349 = vcmp.lt.s32.totalorder %v335, 0
        %vm350 = vcmp.lt.s32.totalorder %v342, 0
        %vm351 = vmand %vm347, %vm343
        %vm352 = vmand %vm348, %vm344
        %vm353 = vmand %vm349, %vm345
        %vm354 = vmand %vm350, %vm346
        %v355 = vadd.s32 %v321, 128
        %v356 = vadd.s32 %v328, 128
        %v357 = vadd.s32 %v335, 128
        %v358 = vadd.s32 %v342, 128
        %v359 = vsel %vm351, %v355, %v321
        %v360 = vsel %vm352, %v356, %v328
        %v361 = vsel %vm353, %v357, %v335
        %v362 = vsel %vm354, %v358, %v342
        %vm363 = vcmp.lt.s32.totalorder %v359, 64
        %vm364 = vcmp.lt.s32.totalorder %v360, 64
        %vm365 = vcmp.lt.s32.totalorder %v361, 64
        %vm366 = vcmp.lt.s32.totalorder %v362, 64
        %v367 = vsel %vm363, 1, 0
        %v368 = vsel %vm364, 1, 0
        %v369 = vsel %vm365, 1, 0
        %v370 = vsel %vm366, 1, 0
        %vm371 = vcmp.eq.s32.totalorder %v367, 1
        %vm372 = vcmp.eq.s32.totalorder %v368, 1
        %vm373 = vcmp.eq.s32.totalorder %v369, 1
        %vm374 = vcmp.eq.s32.totalorder %v370, 1
        %v375 = vsel %vm371, %v310, %v311
        %v376 = vsel %vm372, %v309, %v310
        %v377 = vsel %vm373, %v308, %v309
        %v378 = vsel %vm374, %v311, %v308
        %v379 = vmul.f32 %v293, %v286
        %v380 = vmul.f32 %v294, %v286
        %v381 = vmul.f32 %v295, %v286
        %v382 = vmul.f32 %v296, %v286
        %v383 = vmul.f32 %v375, %v292
        %v384 = vmul.f32 %v376, %v292
        %v385 = vmul.f32 %v377, %v292
        %v386 = vmul.f32 %v378, %v292
        %v387 = vadd.f32 %v379, %v383
        %v388 = vadd.f32 %v380, %v384
        %v389 = vadd.f32 %v381, %v385
        %v390 = vadd.f32 %v382, %v386
        %391 = vst [vmem:[%s268] sm:$0xff] %v387
        %392 = vst [vmem:[%s268 + $0x8] sm:$0xff] %v388
        %393 = vst [vmem:[%s268 + $0x10] sm:$0xff] %v389
        %394 = vst [vmem:[%s268 + $0x18] sm:$0xff] %v390
        %v395 = vld [vmem:[%s237] sm:$0xff]
        %v396 = vld [vmem:[%s237 + $0x8] sm:$0xff]
        %397 = vrot.lane.b32.xlu0 %v395, 64
        %v398 = vpop.permute.xlu0 %397
        %399 = vrot.lane.b32.xlu0 %v396, 64
        %v400 = vpop.permute.xlu0 %399
        %v401 = vsel %vm307, %v398, %v400
        %v402 = vsel %vm307, %v400, %v398
        %v403 = vsel %vm371, %v401, %v402
        %v404 = vsel %vm372, %v402, %v401
        %v405 = vmul.f32 %v395, %v286
        %v406 = vmul.f32 %v396, %v286
        %v407 = vmul.f32 %v403, %v292
        %v408 = vmul.f32 %v404, %v292
        %v409 = vadd.f32 %v405, %v407
        %v410 = vadd.f32 %v406, %v408
        %411 = vst [vmem:[%s275] sm:$0xff] %v409
        %412 = vst [vmem:[%s275 + $0x8] sm:$0xff] %v410
        %s413 = sand.u32 %s114, 1
        %s414 = scalar_lea.sflag [#allocation4], %s413
        %s415 = sand.u32 %s114, 1
        %s416 = smul.addr %s415, 32
        %s417 = scalar_lea.vmem [#allocation7], %s416
        %s418 = sand.u32 %s140, 1
        %s419 = scalar_lea.sflag [#allocation9], %s418
        %s420 = sand.u32 %s140, 1
        %s421 = smul.addr %s420, 16
        %s422 = scalar_lea.vmem [#allocation8], %s421
        // Predicated region
        $region41: #{rope_with_long_lora.1} parent=31 // pred_check
          %p423 = pneg %p124
        $region42: #{rope_with_long_lora.1} parent=31 // pred_check_branch
          %425 = sbr.rel (%p423) target = $region44
        $region43: #{rope_with_long_lora.1} parent=31 // pred_region
          %s427 = ssub.s32 512, 512
          %428 = vsyncadd %s414, %s427
          %s429 = smul.addr %s28, 4
          %s430 = smul.addr %s429, 128
          %s431 = scalar_lea.hbm %s3, %s430
          %s433 = sshll.u32 %s417, 4
          %s434 = int_to_ptr.vmem [resolvable:$true] %s433
          %436 = dma.vmem_to_hbm [thread:$0]  %s434, 512, %s431, %s414
        $region44: #{rope_with_long_lora.1} parent=31 // pred_fallthru
          _
        // Predicated region
        $region45: #{rope_with_long_lora.1} parent=31 // pred_check
          %p437 = pneg %p150
        $region46: #{rope_with_long_lora.1} parent=31 // pred_check_branch
          %439 = sbr.rel (%p437) target = $region48
        $region47: #{rope_with_long_lora.1} parent=31 // pred_region
          %s441 = ssub.s32 256, 256
          %442 = vsyncadd %s419, %s441
          %s443 = smul.addr %s28, 2
          %s444 = smul.addr %s443, 128
          %s445 = scalar_lea.hbm %s4, %s444
          %s447 = sshll.u32 %s422, 4
          %s448 = int_to_ptr.vmem [resolvable:$true] %s447
          %450 = dma.vmem_to_hbm [thread:$0]  %s448, 256, %s445, %s419
        $region48: #{rope_with_long_lora.1} parent=31 // pred_fallthru
          _
      $region32: #{rope_with_long_lora.1} parent=5 // pred_fallthru
        _
      %p451 = scmp.le.s32.totalorder 2, %s23
      // Predicated region
      $region49: #{rope_with_long_lora.1} parent=5 // pred_check
        %p452 = pneg %p451
      $region50: #{rope_with_long_lora.1} parent=5 // pred_check_branch
        %454 = sbr.rel (%p452) target = $region52
      $region51: #{rope_with_long_lora.1} parent=5 // pred_region
        %s455 = ssub.s32 %s23, 2
        // Predicated region
        $region53: #{rope_with_long_lora.1} parent=51 // pred_check
          %p456 = pneg %p130
        $region54: #{rope_with_long_lora.1} parent=51 // pred_check_branch
          %458 = sbr.rel (%p456) target = $region56
        $region55: #{rope_with_long_lora.1} parent=51 // pred_region
          %s459 = sand.u32 %s115, 1
          %s460 = scalar_lea.sflag [#allocation4], %s459
          %s461 = sand.u32 %s115, 1
          %s462 = smul.addr %s461, 32
          %s463 = scalar_lea.vmem [#allocation7], %s462
          %464 = dma.done %s460, 512
        $region56: #{rope_with_long_lora.1} parent=51 // pred_fallthru
          _
        // Predicated region
        $region57: #{rope_with_long_lora.1} parent=51 // pred_check
          %p465 = pneg %p156
        $region58: #{rope_with_long_lora.1} parent=51 // pred_check_branch
          %467 = sbr.rel (%p465) target = $region60
        $region59: #{rope_with_long_lora.1} parent=51 // pred_region
          %s468 = sand.u32 %s141, 1
          %s469 = scalar_lea.sflag [#allocation9], %s468
          %s470 = sand.u32 %s141, 1
          %s471 = smul.addr %s470, 16
          %s472 = scalar_lea.vmem [#allocation8], %s471
          %473 = dma.done %s469, 256
        $region60: #{rope_with_long_lora.1} parent=51 // pred_fallthru
          _
      $region52: #{rope_with_long_lora.1} parent=5 // pred_fallthru
        _
    $region6: #{rope_with_long_lora.1} parent=1 // loop_footer
      %s27 = sadd.s32 1, %s23
    $region7: #{rope_with_long_lora.1} parent=1 // loop_footer_branch
      %22 = sbr.rel target = $region3
    $region8: #{rope_with_long_lora.1} parent=1 // loop_exit
      _
    %474 = vsyncpa [#allocation3], 1
    %s475 = scalar_lea.sflag [#allocation3], 1
    %476 = vsyncpa %s475, 1
    %477 = vsyncpa [#allocation6], 1
    %s478 = scalar_lea.sflag [#allocation6], 1
    %479 = vsyncpa %s478, 1
    %480 = vsyncpa [#allocation4], 1
    %s481 = scalar_lea.sflag [#allocation4], 1
    %482 = vsyncpa %s481, 1
    %483 = vsyncpa [#allocation9], 1
    %s484 = scalar_lea.sflag [#allocation9], 1
    %485 = vsyncpa %s484, 1

</llo_original>
